<compile_context>
chip_gen: v6e
topology: v6e:2x2x1
jax: 0.10.0
libtpu: 0.0.40
codegen_flags: <defaults>
</compile_context>

<pallas_src>
import functools

import jax
import jax.numpy as jnp
import numpy as np
from jax.experimental import pallas as pl
from jax.experimental.pallas import tpu as pltpu


def _tokenizer_kernel(x_ref, t_ref, wtr_ref, wv_ref, o_ref,
                      wrt_ref, m_ref, s_ref, acc_ref, *, approx_recip=False):
    # x_ref:   (Bt, C, tN)   feature-map tile (batch block x N tile)
    # t_ref:   (Bt*L, D)     tokens, row (b*L + l) = T_in[b, :, l]
    # wtr_ref: (C, D)        W_tr weight, pre-scaled by 1/sqrt(C)
    # wv_ref:  (D, C)        W_v weight
    # o_ref:   (L, Bt*D)     lane-dense packed output, col (b*D + d) = out[b, d, l]
    # wrt_ref: (Bt*L, C)     scratch: token projection (computed once per batch block)
    # m_ref/s_ref: (Bt,L,1)  online-softmax running max / sum (f32)
    # acc_ref: (Bt, L, D)    output accumulator (f32)
    bt = x_ref.shape[0]
    l = t_ref.shape[0] // bt
    cdt = x_ref.dtype

    n_idx = pl.program_id(1)
    n_last = pl.num_programs(1) - 1

    @pl.when(n_idx == 0)
    def _init():
        # Widened token projection for the whole batch block (one MXU dot):
        #   wrt[b*L + l, c] = sum_d (W_tr[c, d]/sqrt(C)) * T_in[b, d, l]
        wrt = jax.lax.dot_general(
            t_ref[...], wtr_ref[...], (((1,), (1,)), ((), ())),
            preferred_element_type=jnp.float32)
        wrt_ref[...] = wrt.astype(wrt_ref.dtype)
        m_ref[...] = jnp.full_like(m_ref, -jnp.inf)
        s_ref[...] = jnp.zeros_like(s_ref)
        acc_ref[...] = jnp.zeros_like(acc_ref)

    x = x_ref[...]                                              # (Bt, C, tN)
    wr3 = wrt_ref[...].reshape(bt, l, -1)                       # (Bt, L, C)

    # proj[b, l, n] = sum_c wr3[b, l, c] * x[b, c, n]   (already /sqrt(C))
    proj = jnp.einsum("blc,bcn->bln", wr3, x,
                      preferred_element_type=jnp.float32)       # (Bt, L, tN) f32

    # vals[b, d, n] = sum_c W_v[d, c] * x[b, c, n]
    # (Bt copies of W_v is a few vregs; batched einsum matches the proven
    #  flash-attention lowering pattern and yields (Bt, D, tN) directly.)
    wv_b = jnp.broadcast_to(wv_ref[...], (bt,) + wv_ref.shape)  # (Bt, D, C)
    vals = jnp.einsum("bdc,bcn->bdn", wv_b, x,
                      preferred_element_type=jnp.float32)       # (Bt, D, tN)

    # Online softmax over the streamed N axis (math stays f32).
    m_prev = m_ref[...]                                         # (Bt, L, 1)
    m_new = jnp.maximum(m_prev, jnp.max(proj, axis=-1, keepdims=True))
    alpha = jnp.exp(m_prev - m_new)                             # (Bt, L, 1)
    p = jnp.exp(proj - m_new)                                   # (Bt, L, tN)
    s_ref[...] = alpha * s_ref[...] + jnp.sum(p, axis=-1, keepdims=True)
    m_ref[...] = m_new

    # acc[b, l, d] += sum_n p[b, l, n] * vals[b, d, n]
    pv = jnp.einsum("bln,bdn->bld", p.astype(cdt), vals.astype(cdt),
                    preferred_element_type=jnp.float32)         # (Bt, L, D)
    acc_ref[...] = alpha * acc_ref[...] + pv

    @pl.when(n_idx == n_last)
    def _finalize():
        inv_s = pl.reciprocal(s_ref[...], approx=approx_recip)  # (Bt, L, 1)
        out = acc_ref[...] * inv_s                              # (Bt, L, D) f32
        # Lane-dense pack (Bt, L, D) -> (L, Bt*D); single full-block store.
        packed = jnp.concatenate([out[b] for b in range(bt)], axis=-1)
        o_ref[...] = packed.astype(o_ref.dtype)


def recurrent_tokenizer(X, T_in, W_tr_w, W_v_w, *, block_b=None, block_n=None,
                        compute_dtype=None, approx_recip=False):
    """X: (B, C, N), T_in: (B, D, L), W_tr_w: (C, D), W_v_w: (D, C) -> (B, D, L)."""
    B, C, N = X.shape
    _, D, L = T_in.shape
    out_dtype = X.dtype

    # Batch blocking: keep >= 2 "parallel" grid steps so both v7x TensorCores
    # get work; neutral on single-TC v5e/v6e.
    if block_b is None:
        block_b = max(1, min(8, B // 2)) if B > 1 else 1
    block_b = max(1, min(block_b, B))
    while B % block_b:
        block_b -= 1
    grid_b = B // block_b
    if grid_b > 1 and L % 8 != 0:
        block_b, grid_b = B, 1          # keep row blocks (8, .)-aligned

    # Spatial (N) streaming tile; innermost "arbitrary" (reduction) grid axis.
    if block_n is None:
        block_n = 512 if N % 512 == 0 else N
    if block_n >= N or N % block_n or block_n % 128:
        block_n = N                     # single N step (full-dim block is legal)
    grid_n = pl.cdiv(N, block_n)

    # Fold the 1/sqrt(C) attention scale into W_tr once, outside the hot path.
    wtr_scaled = (W_tr_w.astype(jnp.float32) / np.sqrt(C)).astype(W_tr_w.dtype)

    # Tokens as rows (B*L, D): row b*L + l = T_in[b, :, l] (cheap XLA relayout).
    t_rows = jnp.transpose(T_in, (0, 2, 1)).reshape(B * L, D)

    cdt = jnp.dtype(compute_dtype) if compute_dtype is not None else X.dtype
    Xc = X.astype(cdt)
    t_rows = t_rows.astype(cdt)
    wtr_scaled = wtr_scaled.astype(cdt)
    wv = W_v_w.astype(cdt)

    # Explicit scoped-VMEM budget (v5e default is only 16 MiB): roughly 2x the
    # (double-buffered) per-step inputs+outputs plus scratch, clamped to what
    # is safe on every generation (v7x physical VMEM is 64 MiB).
    isz = jnp.dtype(cdt).itemsize
    per_step = (block_b * C * block_n + block_b * L * D + 2 * C * D
                + L * block_b * D) * isz
    scratch_bytes = block_b * L * C * isz + 4 * block_b * L * (D + 2)
    vmem_limit = int(min(max(4 * per_step + 2 * scratch_bytes, 32 << 20), 64 << 20))

    kernel = functools.partial(_tokenizer_kernel, approx_recip=approx_recip)

    out_packed = pl.pallas_call(
        kernel,
        out_shape=jax.ShapeDtypeStruct((grid_b * L, block_b * D), out_dtype),
        grid=(grid_b, grid_n),
        in_specs=[
            pl.BlockSpec((block_b, C, block_n), lambda g, n: (g, 0, n)),
            pl.BlockSpec((block_b * L, D), lambda g, n: (g, 0)),
            pl.BlockSpec((C, D), lambda g, n: (0, 0)),
            pl.BlockSpec((D, C), lambda g, n: (0, 0)),
        ],
        out_specs=pl.BlockSpec((L, block_b * D), lambda g, n: (g, 0)),
        scratch_shapes=[
            pltpu.VMEM((block_b * L, C), cdt),          # token projection (W_r)
            pltpu.VMEM((block_b, L, 1), jnp.float32),   # online-softmax running max
            pltpu.VMEM((block_b, L, 1), jnp.float32),   # online-softmax running sum
            pltpu.VMEM((block_b, L, D), jnp.float32),   # output accumulator
        ],
        compiler_params=pltpu.CompilerParams(
            dimension_semantics=("parallel", "arbitrary"),
            vmem_limit_bytes=vmem_limit,
        ),
    )(Xc, t_rows, wtr_scaled, wv)

    # (grid_b*L, block_b*D) -> (B, D, L), matching the PyTorch module output.
    # TODO(synk): if the downstream consumer accepts (B, L, D), return
    # out_packed.reshape(grid_b, L, block_b, D).transpose(0, 2, 1, 3).reshape(B, L, D)
    # instead and skip the narrow-lane (last dim = L) relayout below.
    return (out_packed.reshape(grid_b, L, block_b, D)
            .transpose(0, 2, 3, 1).reshape(B, D, L))


def _reference(X, T_in, W_tr_w, W_v_w):
    # Pure-JAX reference mirroring the PyTorch forward.
    C = X.shape[1]
    wr = jnp.einsum("cd,bdl->bcl", W_tr_w, T_in)             # conv1d k=1
    W_r = jnp.transpose(wr, (0, 2, 1))                       # (B, L, C)
    proj = jnp.einsum("blc,bcn->bln", W_r, X) / np.sqrt(C)   # (B, L, N)
    attn = jax.nn.softmax(proj, axis=2)                      # softmax over N
    attn_T = jnp.transpose(attn, (0, 2, 1))                  # (B, N, L)
    values = jnp.einsum("dc,bcn->bdn", W_v_w, X)             # (B, D, N)
    return jnp.einsum("bdn,bnl->bdl", values, attn_T)        # (B, D, L)


if __name__ == "__main__":
    # Small, deterministic shapes consistent with the module:
    # feature_map_cs C=32, visual_tokens_cs D=64, spatial 16x16 -> N=256, L=8 tokens.
    B, C, D = 2, 32, 64
    H = W = 16
    N = H * W
    L = 8

    key = jax.random.PRNGKey(0)
    k_x, k_t, k_wtr, k_wv = jax.random.split(key, 4)

    # Feature map starts NCHW (as PyTorch conv inputs) then flattened to (B, C, N).
    X_nchw = jax.random.normal(k_x, (B, C, H, W), dtype=jnp.float32)
    X = X_nchw.reshape(B, C, N)
    T_in = jax.random.normal(k_t, (B, D, L), dtype=jnp.float32)

    # Conv1d(k=1, bias=False) weights, deterministically initialized in-script.
    W_tr_w = jax.random.normal(k_wtr, (C, D), dtype=jnp.float32) * (1.0 / np.sqrt(D))
    W_v_w = jax.random.normal(k_wv, (D, C), dtype=jnp.float32) * (1.0 / np.sqrt(C))

    ref = jax.block_until_ready(_reference(X, T_in, W_tr_w, W_v_w))

    # Config 1 (default): block_b=1 -> grid=(2,1); both "parallel" steps usable
    # on v7x, single N step.
    out1 = jax.block_until_ready(recurrent_tokenizer(X, T_in, W_tr_w, W_v_w))
    assert out1.shape == (B, D, L), out1.shape
    np.testing.assert_allclose(np.asarray(out1), np.asarray(ref), rtol=1e-4, atol=1e-4)

    # Config 2: block_b=2 (lane-dense 128-wide output store) + block_n=128 so
    # the online-softmax N-streaming path runs for 2 steps.
    out2 = jax.block_until_ready(
        recurrent_tokenizer(X, T_in, W_tr_w, W_v_w, block_b=2, block_n=128))
    assert out2.shape == (B, D, L), out2.shape
    np.testing.assert_allclose(np.asarray(out2), np.asarray(ref), rtol=1e-4, atol=1e-4)

    print("KERNEL_OK")
</pallas_src>

<mosaic_0001>
module attributes {stable_mosaic.version = 11 : i64} {
  func.func @_tokenizer_kernel(%arg0: i32, %arg1: i32, %arg2: memref<1x32x256xf32, #tpu.memory_space<vmem>>, %arg3: memref<8x64xf32, #tpu.memory_space<vmem>>, %arg4: memref<32x64xf32, #tpu.memory_space<vmem>>, %arg5: memref<64x32xf32, #tpu.memory_space<vmem>>, %arg6: memref<8x64xf32, #tpu.memory_space<vmem>>, %arg7: memref<8x32xf32, #tpu.memory_space<vmem>>, %arg8: memref<1x8x1xf32, #tpu.memory_space<vmem>>, %arg9: memref<1x8x1xf32, #tpu.memory_space<vmem>>, %arg10: memref<1x8x64xf32, #tpu.memory_space<vmem>>) attributes {dimension_semantics = [#tpu.dimension_semantics<parallel>, #tpu.dimension_semantics<arbitrary>], iteration_bounds = array<i64: 2, 1>, scalar_prefetch = 0 : i64, scratch_operands = 4 : i64, tpu.core_type = #tpu.core_type<tc>, window_params = [{transform_indices = @transform_0, window_bounds = array<i64: 1, 32, 256>}, {transform_indices = @transform_1, window_bounds = array<i64: 8, 64>}, {pipeline_mode = #tpu.pipeline_mode<synchronous>, transform_indices = @transform_2, window_bounds = array<i64: 32, 64>}, {pipeline_mode = #tpu.pipeline_mode<synchronous>, transform_indices = @transform_3, window_bounds = array<i64: 64, 32>}, {transform_indices = @transform_4, window_bounds = array<i64: 8, 64>}]} {
    %c0_i32 = arith.constant 0 : i32
    %0 = arith.cmpi eq, %arg1, %c0_i32 : i32
    %1 = arith.extui %0 : i1 to i32
    %c0_i32_0 = arith.constant 0 : i32
    %2 = arith.cmpi ne, %1, %c0_i32_0 : i32
    scf.if %2 {
      %c0_31 = arith.constant 0 : index
      %c0_32 = arith.constant 0 : index
      %35 = vector.load %arg3[%c0_31, %c0_32] : memref<8x64xf32, #tpu.memory_space<vmem>>, vector<8x64xf32>
      %c0_33 = arith.constant 0 : index
      %c0_34 = arith.constant 0 : index
      %36 = vector.load %arg4[%c0_33, %c0_34] : memref<32x64xf32, #tpu.memory_space<vmem>>, vector<32x64xf32>
      %cst_35 = arith.constant dense<0.000000e+00> : vector<8x32xf32>
      %37 = tpu.matmul %35, %36, %cst_35 {dimension_numbers = #tpu.dot_dimension_numbers<[1], [1], [0], [0], [0, 0, 1, 0], [], []>} : vector<8x64xf32>, vector<32x64xf32>, vector<8x32xf32> -> vector<8x32xf32>
      %c0_36 = arith.constant 0 : index
      %c0_37 = arith.constant 0 : index
      %38 = vector.load %arg7[%c0_36, %c0_37] : memref<8x32xf32, #tpu.memory_space<vmem>>, vector<8x32xf32>
      tpu.vector_store %arg7[%c0_36, %c0_37], %37 {strides = array<i32>} : memref<8x32xf32, #tpu.memory_space<vmem>>, vector<8x32xf32>,
      %cst_38 = arith.constant 0xFF800000 : f32
      %39 = vector.broadcast %cst_38 : f32 to vector<1x8x1xf32>
      %c0_39 = arith.constant 0 : index
      %c0_40 = arith.constant 0 : index
      %c0_41 = arith.constant 0 : index
      %40 = vector.load %arg8[%c0_39, %c0_40, %c0_41] : memref<1x8x1xf32, #tpu.memory_space<vmem>>, vector<1x8x1xf32>
      tpu.vector_store %arg8[%c0_39, %c0_40, %c0_41], %39 {strides = array<i32>} : memref<1x8x1xf32, #tpu.memory_space<vmem>>, vector<1x8x1xf32>,
      %cst_42 = arith.constant 0.000000e+00 : f32
      %41 = vector.broadcast %cst_42 : f32 to vector<1x8x1xf32>
      %c0_43 = arith.constant 0 : index
      %c0_44 = arith.constant 0 : index
      %c0_45 = arith.constant 0 : index
      %42 = vector.load %arg9[%c0_43, %c0_44, %c0_45] : memref<1x8x1xf32, #tpu.memory_space<vmem>>, vector<1x8x1xf32>
      tpu.vector_store %arg9[%c0_43, %c0_44, %c0_45], %41 {strides = array<i32>} : memref<1x8x1xf32, #tpu.memory_space<vmem>>, vector<1x8x1xf32>,
      %cst_46 = arith.constant 0.000000e+00 : f32
      %43 = vector.broadcast %cst_46 : f32 to vector<1x8x64xf32>
      %c0_47 = arith.constant 0 : index
      %c0_48 = arith.constant 0 : index
      %c0_49 = arith.constant 0 : index
      %44 = vector.load %arg10[%c0_47, %c0_48, %c0_49] : memref<1x8x64xf32, #tpu.memory_space<vmem>>, vector<1x8x64xf32>
      tpu.vector_store %arg10[%c0_47, %c0_48, %c0_49], %43 {strides = array<i32>} : memref<1x8x64xf32, #tpu.memory_space<vmem>>, vector<1x8x64xf32>,
    } else {
    }
    %c0 = arith.constant 0 : index
    %c0_1 = arith.constant 0 : index
    %c0_2 = arith.constant 0 : index
    %3 = vector.load %arg2[%c0, %c0_1, %c0_2] : memref<1x32x256xf32, #tpu.memory_space<vmem>>, vector<1x32x256xf32>
    %c0_3 = arith.constant 0 : index
    %c0_4 = arith.constant 0 : index
    %4 = vector.load %arg7[%c0_3, %c0_4] : memref<8x32xf32, #tpu.memory_space<vmem>>, vector<8x32xf32>
    %5 = vector.shape_cast %4 : vector<8x32xf32> to vector<1x8x32xf32>
    "tpu.trace_start"() <{level = 10 : i32, message = "blc,bcn->bln"}> : () -> ()
    %cst = arith.constant dense<0.000000e+00> : vector<1x8x256xf32>
    %6 = tpu.matmul %5, %3, %cst {dimension_numbers = #tpu.dot_dimension_numbers<[2], [1], [1], [2], [0, 0, 0, 1, 1, 2], [0], [0]>} : vector<1x8x32xf32>, vector<1x32x256xf32>, vector<1x8x256xf32> -> vector<1x8x256xf32>
    "tpu.trace_stop"() : () -> ()
    %c0_5 = arith.constant 0 : index
    %c0_6 = arith.constant 0 : index
    %7 = vector.load %arg5[%c0_5, %c0_6] : memref<64x32xf32, #tpu.memory_space<vmem>>, vector<64x32xf32>
    %8 = vector.shape_cast %7 : vector<64x32xf32> to vector<1x64x32xf32>
    "tpu.trace_start"() <{level = 10 : i32, message = "bdc,bcn->bdn"}> : () -> ()
    %cst_7 = arith.constant dense<0.000000e+00> : vector<1x64x256xf32>
    %9 = tpu.matmul %8, %3, %cst_7 {dimension_numbers = #tpu.dot_dimension_numbers<[2], [1], [1], [2], [0, 0, 0, 1, 1, 2], [0], [0]>} : vector<1x64x32xf32>, vector<1x32x256xf32>, vector<1x64x256xf32> -> vector<1x64x256xf32>
    "tpu.trace_stop"() : () -> ()
    %c0_8 = arith.constant 0 : index
    %c0_9 = arith.constant 0 : index
    %c0_10 = arith.constant 0 : index
    %10 = vector.load %arg8[%c0_8, %c0_9, %c0_10] : memref<1x8x1xf32, #tpu.memory_space<vmem>>, vector<1x8x1xf32>
    %cst_11 = arith.constant dense<0xFF800000> : vector<1x8xf32>
    %11 = vector.multi_reduction <maximumf>, %6, %cst_11 [2] : vector<1x8x256xf32> to vector<1x8xf32>
    %12 = vector.shape_cast %11 : vector<1x8xf32> to vector<1x8x1xf32>
    %13 = arith.maximumf %10, %12 : vector<1x8x1xf32>
    %14 = arith.subf %10, %13 : vector<1x8x1xf32>
    %15 = math.exp %14 : vector<1x8x1xf32>
    %16 = vector.broadcast %13 : vector<1x8x1xf32> to vector<1x8x256xf32>
    %17 = arith.subf %6, %16 : vector<1x8x256xf32>
    %18 = math.exp %17 : vector<1x8x256xf32>
    %c0_12 = arith.constant 0 : index
    %c0_13 = arith.constant 0 : index
    %c0_14 = arith.constant 0 : index
    %19 = vector.load %arg9[%c0_12, %c0_13, %c0_14] : memref<1x8x1xf32, #tpu.memory_space<vmem>>, vector<1x8x1xf32>
    %20 = arith.mulf %15, %19 : vector<1x8x1xf32>
    %cst_15 = arith.constant dense<0.000000e+00> : vector<1x8xf32>
    %21 = vector.multi_reduction <add>, %18, %cst_15 [2] : vector<1x8x256xf32> to vector<1x8xf32>
    %22 = vector.shape_cast %21 : vector<1x8xf32> to vector<1x8x1xf32>
    %23 = arith.addf %20, %22 : vector<1x8x1xf32>
    %c0_16 = arith.constant 0 : index
    %c0_17 = arith.constant 0 : index
    %c0_18 = arith.constant 0 : index
    %24 = vector.load %arg9[%c0_16, %c0_17, %c0_18] : memref<1x8x1xf32, #tpu.memory_space<vmem>>, vector<1x8x1xf32>
    tpu.vector_store %arg9[%c0_16, %c0_17, %c0_18], %23 {strides = array<i32>} : memref<1x8x1xf32, #tpu.memory_space<vmem>>, vector<1x8x1xf32>,
    %c0_19 = arith.constant 0 : index
    %c0_20 = arith.constant 0 : index
    %c0_21 = arith.constant 0 : index
    %25 = vector.load %arg8[%c0_19, %c0_20, %c0_21] : memref<1x8x1xf32, #tpu.memory_space<vmem>>, vector<1x8x1xf32>
    tpu.vector_store %arg8[%c0_19, %c0_20, %c0_21], %13 {strides = array<i32>} : memref<1x8x1xf32, #tpu.memory_space<vmem>>, vector<1x8x1xf32>,
    "tpu.trace_start"() <{level = 10 : i32, message = "bln,bdn->bld"}> : () -> ()
    %cst_22 = arith.constant dense<0.000000e+00> : vector<1x8x64xf32>
    %26 = tpu.matmul %18, %9, %cst_22 {dimension_numbers = #tpu.dot_dimension_numbers<[2], [2], [1], [1], [0, 0, 0, 1, 1, 1], [0], [0]>} : vector<1x8x256xf32>, vector<1x64x256xf32>, vector<1x8x64xf32> -> vector<1x8x64xf32>
    "tpu.trace_stop"() : () -> ()
    %c0_23 = arith.constant 0 : index
    %c0_24 = arith.constant 0 : index
    %c0_25 = arith.constant 0 : index
    %27 = vector.load %arg10[%c0_23, %c0_24, %c0_25] : memref<1x8x64xf32, #tpu.memory_space<vmem>>, vector<1x8x64xf32>
    %28 = vector.broadcast %15 : vector<1x8x1xf32> to vector<1x8x64xf32>
    %29 = arith.mulf %28, %27 : vector<1x8x64xf32>
    %30 = arith.addf %29, %26 : vector<1x8x64xf32>
    %c0_26 = arith.constant 0 : index
    %c0_27 = arith.constant 0 : index
    %c0_28 = arith.constant 0 : index
    %31 = vector.load %arg10[%c0_26, %c0_27, %c0_28] : memref<1x8x64xf32, #tpu.memory_space<vmem>>, vector<1x8x64xf32>
    tpu.vector_store %arg10[%c0_26, %c0_27, %c0_28], %30 {strides = array<i32>} : memref<1x8x64xf32, #tpu.memory_space<vmem>>, vector<1x8x64xf32>,
    %c0_i32_29 = arith.constant 0 : i32
    %32 = arith.cmpi eq, %arg1, %c0_i32_29 : i32
    %33 = arith.extui %32 : i1 to i32
    %c0_i32_30 = arith.constant 0 : i32
    %34 = arith.cmpi ne, %33, %c0_i32_30 : i32
    scf.if %34 {
      %c0_31 = arith.constant 0 : index
      %c0_32 = arith.constant 0 : index
      %c0_33 = arith.constant 0 : index
      %35 = vector.load %arg9[%c0_31, %c0_32, %c0_33] : memref<1x8x1xf32, #tpu.memory_space<vmem>>, vector<1x8x1xf32>
      %36 = tpu.reciprocal %35 : vector<1x8x1xf32> -> vector<1x8x1xf32>
      %c0_34 = arith.constant 0 : index
      %c0_35 = arith.constant 0 : index
      %c0_36 = arith.constant 0 : index
      %37 = vector.load %arg10[%c0_34, %c0_35, %c0_36] : memref<1x8x64xf32, #tpu.memory_space<vmem>>, vector<1x8x64xf32>
      %38 = vector.broadcast %36 : vector<1x8x1xf32> to vector<1x8x64xf32>
      %39 = arith.mulf %37, %38 : vector<1x8x64xf32>
      %40 = vector.shape_cast %39 : vector<1x8x64xf32> to vector<8x64xf32>
      %c0_37 = arith.constant 0 : index
      %c0_38 = arith.constant 0 : index
      %41 = vector.load %arg6[%c0_37, %c0_38] : memref<8x64xf32, #tpu.memory_space<vmem>>, vector<8x64xf32>
      tpu.vector_store %arg6[%c0_37, %c0_38], %40 {strides = array<i32>} : memref<8x64xf32, #tpu.memory_space<vmem>>, vector<8x64xf32>,
    } else {
    }
    return
  }
  func.func @transform_0(%arg0: i32, %arg1: i32) -> (i32, i32, i32) {
    %c0_i32 = arith.constant 0 : i32
    %c0_i32_0 = arith.constant 0 : i32
    return %arg0, %c0_i32, %arg1 : i32, i32, i32
  }
  func.func @transform_1(%arg0: i32, %arg1: i32) -> (i32, i32) {
    %c0_i32 = arith.constant 0 : i32
    %c0_i32_0 = arith.constant 0 : i32
    return %arg0, %c0_i32 : i32, i32
  }
  func.func @transform_2(%arg0: i32, %arg1: i32) -> (i32, i32) {
    %c0_i32 = arith.constant 0 : i32
    %c0_i32_0 = arith.constant 0 : i32
    %c0_i32_1 = arith.constant 0 : i32
    return %c0_i32, %c0_i32_0 : i32, i32
  }
  func.func @transform_3(%arg0: i32, %arg1: i32) -> (i32, i32) {
    %c0_i32 = arith.constant 0 : i32
    %c0_i32_0 = arith.constant 0 : i32
    %c0_i32_1 = arith.constant 0 : i32
    return %c0_i32, %c0_i32_0 : i32, i32
  }
  func.func @transform_4(%arg0: i32, %arg1: i32) -> (i32, i32) {
    %c0_i32 = arith.constant 0 : i32
    %c0_i32_0 = arith.constant 0 : i32
    return %arg0, %c0_i32 : i32, i32
  }
}

</mosaic_0001>

<llo_original>
// kernel: tpu_custom_call.1
$region0: #{tpu_custom_call.1}
  #allocation0 [shape = 'u32[]', space=smem, size = 0x4, offset = 0x4, fixed_abs, tag = 'smem constant byte address 0x4 - core index']
  #allocation1 [shape = 'u32[144,128]{1,0:T(1,128)}', space=vmem, size = 0x12000, scoped, tag = 'internal scratch']
  #allocation2 [shape = 'f32[8,32]{1,0:T(8,128)}', space=vmem, size = 0x1000, scoped, tag = 'scratch operand']
  #allocation3 [shape = 'f32[1,8,1]{2,1,0:T(8,128)}', space=vmem, size = 0x1000, scoped, tag = 'scratch operand']
  #allocation4 [shape = 'f32[1,8,1]{2,1,0:T(8,128)}', space=vmem, size = 0x1000, scoped, tag = 'scratch operand']
  #allocation5 [shape = 'f32[1,8,64]{2,1,0:T(8,128)}', space=vmem, size = 0x1000, scoped, tag = 'scratch operand']
  %s0 = inlined_call_operand.hbm [shape: f32[2,32,256], index: 0, kind: input, shape index: {}]
  %s1 = inlined_call_operand.vmem [shape: f32[16,64], index: 1, kind: input, shape index: {}]
  %s2 = inlined_call_operand.vmem [shape: f32[32,64], index: 2, kind: input, shape index: {}]
  %s3 = inlined_call_operand.vmem [shape: f32[64,32], index: 3, kind: input, shape index: {}]
  %s4 = inlined_call_operand.hbm [shape: f32[16,64], index: 4, kind: output, shape index: {}]
  %s5 = sld [smem:[#allocation0]]
  $region61: #{tpu_custom_call.1} parent=0
    _
  %s7 = ssub.s32 1, %s5
  %s8 = scalar_select 0, %s7, %s5
  $region1: #{tpu_custom_call.1} parent=0
    #allocation6 [shape = 'u8[65536]{0}', space=vmem, size = 0x10000, scoped, tag = 'input window, operand 0']
    #allocation7 [shape = 's32[2]{0}', space=sflag, size = 0x8, scoped, tag = 'scoped memory for tpu_custom_call.1']
    #allocation8 [shape = 's32[2]{0}', space=sflag, size = 0x8, scoped, tag = 'scoped memory for tpu_custom_call.1']
    #allocation9 [shape = 'u8[8192]{0}', space=vmem, size = 0x2000, scoped, tag = 'output window, operand 0']
    %9 = vsyncpa [#allocation7], 0
    %s10 = scalar_lea.sflag [#allocation7], 1
    %11 = vsyncpa %s10, 0
    %12 = vsyncpa [#allocation8], 0
    %s13 = scalar_lea.sflag [#allocation8], 1
    %14 = vsyncpa %s13, 0
    loop: start=0, step=1, limit=4
    $region2: #{tpu_custom_call.1} parent=1 // loop_pre_header
      _
    $region3: #{tpu_custom_call.1} parent=1 // loop_header
      %s16 = sphi 0, %s20
      %p17 = scmp.ge.s32.totalorder %s16, 4
      %s23 = sphi 0, %s35
      %s24 = sphi 0, %s31
      %s25 = sphi 0, %s23
      %s26 = sphi 0, %s24
      %s27 = sphi 0, %s25
      %s28 = sphi 0, %s26
      %s40 = sphi 0, %s42
      %s43 = sphi 0, %s40
      %s44 = sphi 0, %s43
      %s60 = sphi 0, %s44
      %s66 = sphi 0, %s68
      %s69 = sphi 0, %s66
      %s70 = sphi 0, %s69
      %s86 = sphi 0, %s70
      %s90 = sphi 0, %s90
      %s92 = sphi 0, %s90
      %s93 = sphi 0, %s92
      %s107 = sphi 0, %s93
      %s111 = sphi 0, %s111
      %s113 = sphi 0, %s111
      %s114 = sphi 0, %s113
      %s128 = sphi 0, %s114
      %s134 = sphi 0, %s136
      %s137 = sphi 0, %s134
      %s138 = sphi 0, %s137
      %s154 = sphi 0, %s138
    $region4: #{tpu_custom_call.1} parent=1 // loop_header_branch
      %19 = sbr.rel (%p17) target = $region8
    $region5: #{tpu_custom_call.1} parent=1 // loop_body
      %s21 = ssub.s32 %s16, 1
      %s22 = ssub.s32 %s16, 2
      %s29 = sadd.s32 1, %s24
      %p30 = scmp.ge.s32.totalorder %s29, 1
      %s31 = scalar_select %p30, 0, %s29
      %s32 = sadd.s32 1, %s23
      %s33 = scalar_select %p30, %s32, %s23
      %p34 = scmp.ge.s32.totalorder %s33, 2
      %s35 = scalar_select %p34, 0, %s33
      %s36 = ssub.s32 %s23, %s35
      %s37 = ssub.s32 %s24, %s31
      %s38 = sor.u32 %s36, %s37
      %p39 = scmp.eq.s32.totalorder %s38, 0
      %s41 = sadd.s32 %s40, 1
      %s42 = scalar_select %p39, %s40, %s41
      %p45 = pneg %p39
      %p46 = scmp.eq.s32.totalorder %s16, 1
      %p47 = por %p45, %p46
      %p48 = scmp.ne.s32.totalorder %s40, %s43
      %p49 = scmp.eq.s32.totalorder %s16, 0
      %p50 = por %p48, %p49
      %p51 = scmp.ne.s32.totalorder %s40, %s43
      %p52 = scmp.eq.s32.totalorder %s21, 1
      %p53 = por %p51, %p52
      %p54 = scmp.ne.s32.totalorder %s43, %s44
      %p55 = scmp.eq.s32.totalorder %s21, 0
      %p56 = por %p54, %p55
      %p57 = scmp.ne.s32.totalorder %s43, %s44
      %p58 = scmp.eq.s32.totalorder %s22, 1
      %p59 = por %p57, %p58
      %p61 = scmp.ne.s32.totalorder %s44, %s60
      %p62 = scmp.eq.s32.totalorder %s22, 0
      %p63 = por %p61, %p62
      %s64 = ssub.s32 %s23, %s35
      %p65 = scmp.eq.s32.totalorder %s64, 0
      %s67 = sadd.s32 %s66, 1
      %s68 = scalar_select %p65, %s66, %s67
      %p71 = pneg %p65
      %p72 = scmp.eq.s32.totalorder %s16, 1
      %p73 = por %p71, %p72
      %p74 = scmp.ne.s32.totalorder %s66, %s69
      %p75 = scmp.eq.s32.totalorder %s16, 0
      %p76 = por %p74, %p75
      %p77 = scmp.ne.s32.totalorder %s66, %s69
      %p78 = scmp.eq.s32.totalorder %s21, 1
      %p79 = por %p77, %p78
      %p80 = scmp.ne.s32.totalorder %s69, %s70
      %p81 = scmp.eq.s32.totalorder %s21, 0
      %p82 = por %p80, %p81
      %p83 = scmp.ne.s32.totalorder %s69, %s70
      %p84 = scmp.eq.s32.totalorder %s22, 1
      %p85 = por %p83, %p84
      %p87 = scmp.ne.s32.totalorder %s70, %s86
      %p88 = scmp.eq.s32.totalorder %s22, 0
      %p89 = por %p87, %p88
      %s91 = sadd.s32 %s90, 1
      %p94 = scmp.eq.s32.totalorder %s16, 1
      %p95 = scmp.ne.s32.totalorder %s90, %s92
      %p96 = scmp.eq.s32.totalorder %s16, 0
      %p97 = por %p95, %p96
      %p98 = scmp.ne.s32.totalorder %s90, %s92
      %p99 = scmp.eq.s32.totalorder %s21, 1
      %p100 = por %p98, %p99
      %p101 = scmp.ne.s32.totalorder %s92, %s93
      %p102 = scmp.eq.s32.totalorder %s21, 0
      %p103 = por %p101, %p102
      %p104 = scmp.ne.s32.totalorder %s92, %s93
      %p105 = scmp.eq.s32.totalorder %s22, 1
      %p106 = por %p104, %p105
      %p108 = scmp.ne.s32.totalorder %s93, %s107
      %p109 = scmp.eq.s32.totalorder %s22, 0
      %p110 = por %p108, %p109
      %s112 = sadd.s32 %s111, 1
      %p115 = scmp.eq.s32.totalorder %s16, 1
      %p116 = scmp.ne.s32.totalorder %s111, %s113
      %p117 = scmp.eq.s32.totalorder %s16, 0
      %p118 = por %p116, %p117
      %p119 = scmp.ne.s32.totalorder %s111, %s113
      %p120 = scmp.eq.s32.totalorder %s21, 1
      %p121 = por %p119, %p120
      %p122 = scmp.ne.s32.totalorder %s113, %s114
      %p123 = scmp.eq.s32.totalorder %s21, 0
      %p124 = por %p122, %p123
      %p125 = scmp.ne.s32.totalorder %s113, %s114
      %p126 = scmp.eq.s32.totalorder %s22, 1
      %p127 = por %p125, %p126
      %p129 = scmp.ne.s32.totalorder %s114, %s128
      %p130 = scmp.eq.s32.totalorder %s22, 0
      %p131 = por %p129, %p130
      %s132 = ssub.s32 %s23, %s35
      %p133 = scmp.eq.s32.totalorder %s132, 0
      %s135 = sadd.s32 %s134, 1
      %s136 = scalar_select %p133, %s134, %s135
      %p139 = pneg %p133
      %p140 = scmp.eq.s32.totalorder %s16, 1
      %p141 = por %p139, %p140
      %p142 = scmp.ne.s32.totalorder %s134, %s137
      %p143 = scmp.eq.s32.totalorder %s16, 0
      %p144 = por %p142, %p143
      %p145 = scmp.ne.s32.totalorder %s134, %s137
      %p146 = scmp.eq.s32.totalorder %s21, 1
      %p147 = por %p145, %p146
      %p148 = scmp.ne.s32.totalorder %s137, %s138
      %p149 = scmp.eq.s32.totalorder %s21, 0
      %p150 = por %p148, %p149
      %p151 = scmp.ne.s32.totalorder %s137, %s138
      %p152 = scmp.eq.s32.totalorder %s22, 1
      %p153 = por %p151, %p152
      %p155 = scmp.ne.s32.totalorder %s138, %s154
      %p156 = scmp.eq.s32.totalorder %s22, 0
      %p157 = por %p155, %p156
      %p158 = scmp.le.s32.totalorder 1, %s16
      %p159 = scmp.lt.s32.totalorder %s16, 3
      %p160 = pnand %p158, %p159
      %p161 = pneg %p160
      // Predicated region
      $region9: #{tpu_custom_call.1} parent=5 // pred_check
        _
      $region10: #{tpu_custom_call.1} parent=5 // pred_check_branch
        %163 = sbr.rel (%p160) target = $region12
      $region11: #{tpu_custom_call.1} parent=5 // pred_region
        %s164 = ssub.s32 %s16, 1
        // Predicated region
        $region13: #{tpu_custom_call.1} parent=11 // pred_check
          %p165 = pneg %p103
        $region14: #{tpu_custom_call.1} parent=11 // pred_check_branch
          %167 = sbr.rel (%p165) target = $region16
        $region15: #{tpu_custom_call.1} parent=11 // pred_region
          _
        $region16: #{tpu_custom_call.1} parent=11 // pred_fallthru
          _
        // Predicated region
        $region17: #{tpu_custom_call.1} parent=11 // pred_check
          %p168 = pneg %p124
        $region18: #{tpu_custom_call.1} parent=11 // pred_check_branch
          %170 = sbr.rel (%p168) target = $region20
        $region19: #{tpu_custom_call.1} parent=11 // pred_region
          _
        $region20: #{tpu_custom_call.1} parent=11 // pred_fallthru
          _
      $region12: #{tpu_custom_call.1} parent=5 // pred_fallthru
        _
      %p171 = scmp.lt.s32.totalorder %s16, 2
      // Predicated region
      $region21: #{tpu_custom_call.1} parent=5 // pred_check
        %p172 = pneg %p171
      $region22: #{tpu_custom_call.1} parent=5 // pred_check_branch
        %174 = sbr.rel (%p172) target = $region24
      $region23: #{tpu_custom_call.1} parent=5 // pred_region
        // Predicated region
        $region25: #{tpu_custom_call.1} parent=23 // pred_check
          %p175 = pneg %p50
        $region26: #{tpu_custom_call.1} parent=23 // pred_check_branch
          %177 = sbr.rel (%p175) target = $region28
        $region27: #{tpu_custom_call.1} parent=23 // pred_region
          %s178 = sand.u32 %s40, 1
          %s179 = scalar_lea.sflag [#allocation7], %s178
          %s180 = sand.u32 %s40, 1
          %s181 = smul.addr %s180, 64
          %s182 = scalar_lea.vmem [#allocation6], %s181
          %s183 = smul.u32 2, %s24
          %s185 = ssub.s32 1024, 1024
          %186 = vsyncadd %s179, %s185
          %s187 = smul.addr %s23, 8
          %s188 = sadd.s32 %s183, %s187
          %s189 = smul.addr %s188, 128
          %s190 = scalar_lea.hbm %s0, %s189
          %s191 = sshll.u32 %s182, 4
          %s192 = int_to_ptr.vmem [resolvable:$true] %s191
          %197 = dma.hbm_to_vmem [thread:$0]  %s190, 1024, %s192, %s179, 256, 256, 16
        $region28: #{tpu_custom_call.1} parent=23 // pred_fallthru
          _
        // Predicated region
        $region29: #{tpu_custom_call.1} parent=23 // pred_check
          %p198 = pneg %p76
        $region30: #{tpu_custom_call.1} parent=23 // pred_check_branch
          %200 = sbr.rel (%p198) target = $region32
        $region31: #{tpu_custom_call.1} parent=23 // pred_region
          %p201 = scmp.lt.s32.totalorder %s23, 1
          %s202 = scalar_select %p201, %s23, 1
          %s203 = smul.addr %s202, 8
          %s204 = scalar_lea.vmem %s1, %s203
        $region32: #{tpu_custom_call.1} parent=23 // pred_fallthru
          _
      $region24: #{tpu_custom_call.1} parent=5 // pred_fallthru
        _
      %p205 = scmp.le.s32.totalorder 1, %s16
      %p206 = scmp.lt.s32.totalorder %s16, 3
      %p207 = pnand %p205, %p206
      %p208 = pneg %p207
      // Predicated region
      $region33: #{tpu_custom_call.1} parent=5 // pred_check
        _
      $region34: #{tpu_custom_call.1} parent=5 // pred_check_branch
        %210 = sbr.rel (%p207) target = $region36
      $region35: #{tpu_custom_call.1} parent=5 // pred_region
        %s211 = ssub.s32 %s16, 1
        %s212 = sand.u32 %s43, 1
        %s213 = scalar_lea.sflag [#allocation7], %s212
        %s214 = sand.u32 %s43, 1
        %s215 = smul.addr %s214, 64
        %s216 = scalar_lea.vmem [#allocation6], %s215
        // Predicated region
        $region37: #{tpu_custom_call.1} parent=35 // pred_check
          %p217 = pneg %p56
        $region38: #{tpu_custom_call.1} parent=35 // pred_check_branch
          %219 = sbr.rel (%p217) target = $region40
        $region39: #{tpu_custom_call.1} parent=35 // pred_region
          %220 = dma.done %s213, 1024
        $region40: #{tpu_custom_call.1} parent=35 // pred_fallthru
          _
        %s221 = sand.u32 %s43, 1
        %s222 = scalar_lea.sflag [#allocation7], %s221
        %s223 = sand.u32 %s43, 1
        %s224 = smul.addr %s223, 64
        %s225 = scalar_lea.vmem [#allocation6], %s224
        %p226 = pneg %p56
        %p227 = pneg %p53
        %p228 = scmp.lt.s32.totalorder %s25, 1
        %s229 = scalar_select %p228, %s25, 1
        %s230 = smul.addr %s229, 8
        %s231 = scalar_lea.vmem %s1, %s230
        %p232 = pneg %p82
        %p233 = pneg %p79
        %p234 = pneg %p103
        %p235 = pneg %p100
        %p236 = pneg %p124
        %p237 = pneg %p121
        %p238 = pneg %p150
        %p239 = pneg %p147
        %s240 = sand.u32 %s137, 1
        %s241 = scalar_lea.sflag [#allocation8], %s240
        %s242 = sand.u32 %s137, 1
        %s243 = smul.addr %s242, 8
        %s244 = scalar_lea.vmem [#allocation9], %s243
        %s245 = smul.u32 2, %s26
        %p246 = scmp.lt.s32.totalorder %s25, 1
        %s247 = scalar_select %p246, %s25, 1
        %s248 = smul.addr %s247, 8
        %s249 = scalar_lea.vmem %s1, %s248
        %p250 = scmp.eq.s32.totalorder %s26, 0
        // Predicated region
        $region41: #{tpu_custom_call.1} parent=35 // pred_check
          %p251 = pneg %p250
        $region42: #{tpu_custom_call.1} parent=35 // pred_check_branch
          %253 = sbr.rel (%p251) target = $region44
        $region43: #{tpu_custom_call.1} parent=35 // pred_region
          %v254 = vld [vmem:[%s249] sm:$0xff]
          %v255 = vld [vmem:[%s2] sm:$0xff]
          %v256 = vld [vmem:[%s2 + $0x8] sm:$0xff]
          %v257 = vld [vmem:[%s2 + $0x10] sm:$0xff]
          %v258 = vld [vmem:[%s2 + $0x18] sm:$0xff]
          %vm259 = vcmask 523264
          %v261 = vsel %vm259, %v254, 0
          %v264 = vsel %vm259, %v255, 0
          %v267 = vsel %vm259, %v256, 0
          %v270 = vsel %vm259, %v257, 0
          %v273 = vsel %vm259, %v258, 0
          %275 = vmatprep.subr.mxu0 0.0
          %276 = vmatpush1.xpose.msra.mxu0 0.0
          %277 = vmatprep.subr.mxu0 0.0
          %278 = vmatpush1.xpose.msra.mxu0 0.0
          %279 = vmatprep.subr.mxu0 0.0
          %280 = vmatpush1.xpose.msra.mxu0 0.0
          %281 = vmatprep.subr.mxu0 0.0
          %282 = vmatpush1.xpose.msra.mxu0 0.0
          %283 = vmatprep.subr.mxu0 0.0
          %284 = vmatpush1.xpose.msra.mxu0 0.0
          %285 = vmatprep.subr.mxu0 0.0
          %286 = vmatpush1.xpose.msra.mxu0 0.0
          %287 = vmatprep.subr.mxu0 0.0
          %288 = vmatpush1.xpose.msra.mxu0 0.0
          %289 = vmatprep.subr.mxu0 0.0
          %290 = vmatpush1.xpose.msra.mxu0 0.0
          %291 = vmatprep.subr.mxu0 0.0
          %292 = vmatpush1.xpose.msra.mxu0 0.0
          %293 = vmatprep.subr.mxu0 0.0
          %294 = vmatpush1.xpose.msra.mxu0 0.0
          %295 = vmatprep.subr.mxu0 0.0
          %296 = vmatpush1.xpose.msra.mxu0 0.0
          %297 = vmatprep.subr.mxu0 0.0
          %298 = vmatpush1.xpose.msra.mxu0 0.0
          %299 = vmatprep.subr.mxu0 0.0
          %300 = vmatpush1.xpose.msra.mxu0 %v273
          %301 = vmatprep.subr.mxu0 0.0
          %302 = vmatpush1.xpose.msra.mxu0 %v270
          %303 = vmatprep.subr.mxu0 0.0
          %304 = vmatpush1.xpose.msra.mxu0 %v267
          %305 = vmatprep.subr.mxu0 0.0
          %306 = vmatpush1.xpose.msra.mxu0 %v264
          %307 = vmatprep.subr.mxu0 0.0
          %308 = vmatpush2.xpose.msra.mxu0 0.0
          %309 = vmatprep.subr.mxu0 0.0
          %310 = vmatpush2.xpose.msra.mxu0 0.0
          %311 = vmatprep.subr.mxu0 0.0
          %312 = vmatpush2.xpose.msra.mxu0 0.0
          %313 = vmatprep.subr.mxu0 0.0
          %314 = vmatpush2.xpose.msra.mxu0 0.0
          %315 = vmatprep.subr.mxu0 0.0
          %316 = vmatpush2.xpose.msra.mxu0 0.0
          %317 = vmatprep.subr.mxu0 0.0
          %318 = vmatpush2.xpose.msra.mxu0 0.0
          %319 = vmatprep.subr.mxu0 0.0
          %320 = vmatpush2.xpose.msra.mxu0 0.0
          %321 = vmatprep.subr.mxu0 0.0
          %322 = vmatpush2.xpose.msra.mxu0 0.0
          %323 = vmatprep.subr.mxu0 0.0
          %324 = vmatpush2.xpose.msra.mxu0 0.0
          %325 = vmatprep.subr.mxu0 0.0
          %326 = vmatpush2.xpose.msra.mxu0 0.0
          %327 = vmatprep.subr.mxu0 0.0
          %328 = vmatpush2.xpose.msra.mxu0 0.0
          %329 = vmatprep.subr.mxu0 0.0
          %330 = vmatpush2.xpose.msra.mxu0 0.0
          %331 = vmatprep.subr.mxu0 0.0
          %332 = vmatpush2.xpose.msra.mxu0 0.0
          %333 = vmatprep.subr.mxu0 0.0
          %334 = vmatpush2.xpose.msra.mxu0 0.0
          %335 = vmatprep.subr.mxu0 0.0
          %336 = vmatpush2.xpose.msra.mxu0 0.0
          %337 = vmatprep.subr.mxu0 0.0
          %338 = vmatpush2.xpose.msra.mxu0 0.0
          %339 = vmatprep.mubr.f32.mxu0 0.0
          %340 = vmatmul.mubr.f32.gmra.mxu0 %v261
          %v341 = vpop.f32.mrf.mxu0
          %v342 = vadd.f32 0.0, %v341
          %v343 = vpop.f32.mrf.mxu0
          %344 = vdwg.mxu0
          %vm345 = vcmask 261120
          %346 = vst.msk [vmem:[#allocation2] sm:$0xff] %vm345, %v342
          %vm347 = vcmask 7168
          %348 = vst.msk [vmem:[#allocation3] sm:$0xff] %vm347, -inf
          %349 = vst.msk [vmem:[#allocation4] sm:$0xff] %vm347, 0.0
          %350 = vst.msk [vmem:[#allocation5] sm:$0xff] %vm259, 0.0
        $region44: #{tpu_custom_call.1} parent=35 // pred_fallthru
          _
        %v351 = vld [vmem:[%s216] sm:$0xff]
        %v352 = vld [vmem:[%s216 + $0x8] sm:$0xff]
        %v353 = vld [vmem:[%s216 + $0x10] sm:$0xff]
        %v354 = vld [vmem:[%s216 + $0x18] sm:$0xff]
        %v355 = vld [vmem:[%s216 + $0x20] sm:$0xff]
        %v356 = vld [vmem:[%s216 + $0x28] sm:$0xff]
        %v357 = vld [vmem:[%s216 + $0x30] sm:$0xff]
        %v358 = vld [vmem:[%s216 + $0x38] sm:$0xff]
        %v359 = vld [vmem:[#allocation2] sm:$0xff]
        %vm360 = vcmask 261120
        %v362 = vsel %vm360, %v359, 0
        %364 = vmatprep.subr.mxu0 0.0
        %365 = vmatpush1.msra.mxu0 0.0
        %366 = vmatprep.subr.mxu0 0.0
        %367 = vmatpush1.msra.mxu0 0.0
        %368 = vmatprep.subr.mxu0 0.0
        %369 = vmatpush1.msra.mxu0 0.0
        %370 = vmatprep.subr.mxu0 0.0
        %371 = vmatpush1.msra.mxu0 0.0
        %372 = vmatprep.subr.mxu0 0.0
        %373 = vmatpush1.msra.mxu0 0.0
        %374 = vmatprep.subr.mxu0 0.0
        %375 = vmatpush1.msra.mxu0 0.0
        %376 = vmatprep.subr.mxu0 0.0
        %377 = vmatpush1.msra.mxu0 0.0
        %378 = vmatprep.subr.mxu0 0.0
        %379 = vmatpush1.msra.mxu0 0.0
        %380 = vmatprep.subr.mxu0 0.0
        %381 = vmatpush1.msra.mxu0 0.0
        %382 = vmatprep.subr.mxu0 0.0
        %383 = vmatpush1.msra.mxu0 0.0
        %384 = vmatprep.subr.mxu0 0.0
        %385 = vmatpush1.msra.mxu0 0.0
        %386 = vmatprep.subr.mxu0 0.0
        %387 = vmatpush1.msra.mxu0 0.0
        %388 = vmatprep.subr.mxu0 %v358
        %389 = vmatpush1.msra.mxu0 %v357
        %390 = vmatprep.subr.mxu0 %v356
        %391 = vmatpush1.msra.mxu0 %v355
        %392 = vmatprep.subr.mxu0 %v354
        %393 = vmatpush1.msra.mxu0 %v353
        %394 = vmatprep.subr.mxu0 %v352
        %395 = vmatpush1.msra.mxu0 %v351
        %396 = vmatprep.subr.mxu0 0.0
        %397 = vmatpush2.msra.mxu0 0.0
        %398 = vmatprep.subr.mxu0 0.0
        %399 = vmatpush2.msra.mxu0 0.0
        %400 = vmatprep.subr.mxu0 0.0
        %401 = vmatpush2.msra.mxu0 0.0
        %402 = vmatprep.subr.mxu0 0.0
        %403 = vmatpush2.msra.mxu0 0.0
        %404 = vmatprep.subr.mxu0 0.0
        %405 = vmatpush2.msra.mxu0 0.0
        %406 = vmatprep.subr.mxu0 0.0
        %407 = vmatpush2.msra.mxu0 0.0
        %408 = vmatprep.subr.mxu0 0.0
        %409 = vmatpush2.msra.mxu0 0.0
        %410 = vmatprep.subr.mxu0 0.0
        %411 = vmatpush2.msra.mxu0 0.0
        %412 = vmatprep.subr.mxu0 0.0
        %413 = vmatpush2.msra.mxu0 0.0
        %414 = vmatprep.subr.mxu0 0.0
        %415 = vmatpush2.msra.mxu0 0.0
        %416 = vmatprep.subr.mxu0 0.0
        %417 = vmatpush2.msra.mxu0 0.0
        %418 = vmatprep.subr.mxu0 0.0
        %419 = vmatpush2.msra.mxu0 0.0
        %420 = vmatprep.subr.mxu0 0.0
        %421 = vmatpush2.msra.mxu0 0.0
        %422 = vmatprep.subr.mxu0 0.0
        %423 = vmatpush2.msra.mxu0 0.0
        %424 = vmatprep.subr.mxu0 0.0
        %425 = vmatpush2.msra.mxu0 0.0
        %426 = vmatprep.subr.mxu0 0.0
        %427 = vmatpush2.msra.mxu0 0.0
        %428 = vmatprep.mubr.f32.mxu0 0.0
        %429 = vmatmul.mubr.f32.gmra.mxu0 %v362
        %v430 = vpop.f32.mrf.mxu0
        %v431 = vadd.f32 0.0, %v430
        %v432 = vpop.f32.mrf.mxu0
        %v433 = vadd.f32 0.0, %v432
        %434 = vdwg.mxu0
        %v435 = vld [vmem:[%s3] sm:$0xff]
        %v436 = vld [vmem:[%s3 + $0x8] sm:$0xff]
        %v437 = vld [vmem:[%s3 + $0x10] sm:$0xff]
        %v438 = vld [vmem:[%s3 + $0x18] sm:$0xff]
        %v439 = vld [vmem:[%s3 + $0x20] sm:$0xff]
        %v440 = vld [vmem:[%s3 + $0x28] sm:$0xff]
        %v441 = vld [vmem:[%s3 + $0x30] sm:$0xff]
        %v442 = vld [vmem:[%s3 + $0x38] sm:$0xff]
        %v444 = vsel %vm360, %v435, 0
        %v447 = vsel %vm360, %v436, 0
        %v450 = vsel %vm360, %v437, 0
        %v453 = vsel %vm360, %v438, 0
        %v456 = vsel %vm360, %v439, 0
        %v459 = vsel %vm360, %v440, 0
        %v462 = vsel %vm360, %v441, 0
        %v465 = vsel %vm360, %v442, 0
        %467 = vmatprep.subr.mxu0 0.0
        %468 = vmatpush1.msra.mxu0 0.0
        %469 = vmatprep.subr.mxu0 0.0
        %470 = vmatpush1.msra.mxu0 0.0
        %471 = vmatprep.subr.mxu0 0.0
        %472 = vmatpush1.msra.mxu0 0.0
        %473 = vmatprep.subr.mxu0 0.0
        %474 = vmatpush1.msra.mxu0 0.0
        %475 = vmatprep.subr.mxu0 0.0
        %476 = vmatpush1.msra.mxu0 0.0
        %477 = vmatprep.subr.mxu0 0.0
        %478 = vmatpush1.msra.mxu0 0.0
        %479 = vmatprep.subr.mxu0 0.0
        %480 = vmatpush1.msra.mxu0 0.0
        %481 = vmatprep.subr.mxu0 0.0
        %482 = vmatpush1.msra.mxu0 0.0
        %483 = vmatprep.subr.mxu0 0.0
        %484 = vmatpush1.msra.mxu0 0.0
        %485 = vmatprep.subr.mxu0 0.0
        %486 = vmatpush1.msra.mxu0 0.0
        %487 = vmatprep.subr.mxu0 0.0
        %488 = vmatpush1.msra.mxu0 0.0
        %489 = vmatprep.subr.mxu0 0.0
        %490 = vmatpush1.msra.mxu0 0.0
        %491 = vmatprep.subr.mxu0 %v358
        %492 = vmatpush1.msra.mxu0 %v357
        %493 = vmatprep.subr.mxu0 %v356
        %494 = vmatpush1.msra.mxu0 %v355
        %495 = vmatprep.subr.mxu0 %v354
        %496 = vmatpush1.msra.mxu0 %v353
        %497 = vmatprep.subr.mxu0 %v352
        %498 = vmatpush1.msra.mxu0 %v351
        %499 = vmatprep.subr.mxu0 0.0
        %500 = vmatpush2.msra.mxu0 0.0
        %501 = vmatprep.subr.mxu0 0.0
        %502 = vmatpush2.msra.mxu0 0.0
        %503 = vmatprep.subr.mxu0 0.0
        %504 = vmatpush2.msra.mxu0 0.0
        %505 = vmatprep.subr.mxu0 0.0
        %506 = vmatpush2.msra.mxu0 0.0
        %507 = vmatprep.subr.mxu0 0.0
        %508 = vmatpush2.msra.mxu0 0.0
        %509 = vmatprep.subr.mxu0 0.0
        %510 = vmatpush2.msra.mxu0 0.0
        %511 = vmatprep.subr.mxu0 0.0
        %512 = vmatpush2.msra.mxu0 0.0
        %513 = vmatprep.subr.mxu0 0.0
        %514 = vmatpush2.msra.mxu0 0.0
        %515 = vmatprep.subr.mxu0 0.0
        %516 = vmatpush2.msra.mxu0 0.0
        %517 = vmatprep.subr.mxu0 0.0
        %518 = vmatpush2.msra.mxu0 0.0
        %519 = vmatprep.subr.mxu0 0.0
        %520 = vmatpush2.msra.mxu0 0.0
        %521 = vmatprep.subr.mxu0 0.0
        %522 = vmatpush2.msra.mxu0 0.0
        %523 = vmatprep.subr.mxu0 0.0
        %524 = vmatpush2.msra.mxu0 0.0
        %525 = vmatprep.subr.mxu0 0.0
        %526 = vmatpush2.msra.mxu0 0.0
        %527 = vmatprep.subr.mxu0 0.0
        %528 = vmatpush2.msra.mxu0 0.0
        %529 = vmatprep.subr.mxu0 0.0
        %530 = vmatpush2.msra.mxu0 0.0
        %531 = vmatprep.mubr.f32.mxu0 0.0
        %532 = vmatmul.mubr.f32.gmra.mxu0 %v444
        %v533 = vpop.f32.mrf.mxu0
        %v534 = vadd.f32 0.0, %v533
        %v535 = vpop.f32.mrf.mxu0
        %v536 = vadd.f32 0.0, %v535
        %537 = vmatprep.mubr.f32.mxu0 0.0
        %538 = vmatmul.mubr.f32.gmra.mxu0 %v447
        %v539 = vpop.f32.mrf.mxu0
        %v540 = vadd.f32 0.0, %v539
        %v541 = vpop.f32.mrf.mxu0
        %v542 = vadd.f32 0.0, %v541
        %543 = vmatprep.mubr.f32.mxu0 0.0
        %544 = vmatmul.mubr.f32.gmra.mxu0 %v450
        %v545 = vpop.f32.mrf.mxu0
        %v546 = vadd.f32 0.0, %v545
        %v547 = vpop.f32.mrf.mxu0
        %v548 = vadd.f32 0.0, %v547
        %549 = vmatprep.mubr.f32.mxu0 0.0
        %550 = vmatmul.mubr.f32.gmra.mxu0 %v453
        %v551 = vpop.f32.mrf.mxu0
        %v552 = vadd.f32 0.0, %v551
        %v553 = vpop.f32.mrf.mxu0
        %v554 = vadd.f32 0.0, %v553
        %555 = vmatprep.mubr.f32.mxu0 0.0
        %556 = vmatmul.mubr.f32.gmra.mxu0 %v456
        %v557 = vpop.f32.mrf.mxu0
        %v558 = vadd.f32 0.0, %v557
        %v559 = vpop.f32.mrf.mxu0
        %v560 = vadd.f32 0.0, %v559
        %561 = vmatprep.mubr.f32.mxu0 0.0
        %562 = vmatmul.mubr.f32.gmra.mxu0 %v459
        %v563 = vpop.f32.mrf.mxu0
        %v564 = vadd.f32 0.0, %v563
        %v565 = vpop.f32.mrf.mxu0
        %v566 = vadd.f32 0.0, %v565
        %567 = vmatprep.mubr.f32.mxu0 0.0
        %568 = vmatmul.mubr.f32.gmra.mxu0 %v462
        %v569 = vpop.f32.mrf.mxu0
        %v570 = vadd.f32 0.0, %v569
        %v571 = vpop.f32.mrf.mxu0
        %v572 = vadd.f32 0.0, %v571
        %573 = vmatprep.mubr.f32.mxu0 0.0
        %574 = vmatmul.mubr.f32.gmra.mxu0 %v465
        %v575 = vpop.f32.mrf.mxu0
        %v576 = vadd.f32 0.0, %v575
        %v577 = vpop.f32.mrf.mxu0
        %v578 = vadd.f32 0.0, %v577
        %579 = vdwg.mxu0
        %v580 = vld [vmem:[#allocation3] sm:$0xff]
        %v581 = vmax.f32 %v431, %v433
        %582 = vmax.xlane.f32.xlu0 %v581
        %v583 = vpop.xlane.xlu0 %582
        %v584 = vmax.f32 %v580, %v583
        %v585 = vsub.f32 %v580, %v584
        %v586 = vmul.f32 %v585, 1.442695
        %v587 = vpow.pop %v586
        %589 = vset.pattern.permute.xlu0 0
        %590 = vperm.xlu0 %589, %v584
        %v591 = vpop.permute.xlu0 %590
        %v593 = vsub.f32 %v431, %v591
        %v594 = vsub.f32 %v433, %v591
        %v595 = vmul.f32 %v593, 1.442695
        %v596 = vpow.pop %v595
        %v597 = vmul.f32 %v594, 1.442695
        %v598 = vpow.pop %v597
        %v599 = vld [vmem:[#allocation4] sm:$0xff]
        %v600 = vmul.f32 %v587, %v599
        %v601 = vadd.f32 %v596, %v598
        %602 = vadd.xlane.f32.xlu0 %v601
        %v603 = vpop.xlane.xlu0 %602
        %v604 = vadd.f32 %v600, %v603
        %vm605 = vcmask 7168
        %606 = vst.msk [vmem:[#allocation4] sm:$0xff] %vm605, %v604
        %607 = vst.msk [vmem:[#allocation3] sm:$0xff] %vm605, %v584
        %608 = vmatprep.subr.mxu0 0.0
        %609 = vmatpush1.xpose.msra.mxu0 0.0
        %610 = vmatprep.subr.mxu0 0.0
        %611 = vmatpush1.xpose.msra.mxu0 0.0
        %612 = vmatprep.subr.mxu0 0.0
        %613 = vmatpush1.xpose.msra.mxu0 0.0
        %614 = vmatprep.subr.mxu0 0.0
        %615 = vmatpush1.xpose.msra.mxu0 0.0
        %616 = vmatprep.subr.mxu0 0.0
        %617 = vmatpush1.xpose.msra.mxu0 0.0
        %618 = vmatprep.subr.mxu0 0.0
        %619 = vmatpush1.xpose.msra.mxu0 0.0
        %620 = vmatprep.subr.mxu0 0.0
        %621 = vmatpush1.xpose.msra.mxu0 0.0
        %622 = vmatprep.subr.mxu0 0.0
        %623 = vmatpush1.xpose.msra.mxu0 0.0
        %624 = vmatprep.subr.mxu0 %v578
        %625 = vmatpush1.xpose.msra.mxu0 %v576
        %626 = vmatprep.subr.mxu0 %v572
        %627 = vmatpush1.xpose.msra.mxu0 %v570
        %628 = vmatprep.subr.mxu0 %v566
        %629 = vmatpush1.xpose.msra.mxu0 %v564
        %630 = vmatprep.subr.mxu0 %v560
        %631 = vmatpush1.xpose.msra.mxu0 %v558
        %632 = vmatprep.subr.mxu0 %v554
        %633 = vmatpush1.xpose.msra.mxu0 %v552
        %634 = vmatprep.subr.mxu0 %v548
        %635 = vmatpush1.xpose.msra.mxu0 %v546
        %636 = vmatprep.subr.mxu0 %v542
        %637 = vmatpush1.xpose.msra.mxu0 %v540
        %638 = vmatprep.subr.mxu0 %v536
        %639 = vmatpush1.xpose.msra.mxu0 %v534
        %640 = vmatprep.subr.mxu0 0.0
        %641 = vmatpush2.xpose.msra.mxu0 0.0
        %642 = vmatprep.subr.mxu0 0.0
        %643 = vmatpush2.xpose.msra.mxu0 0.0
        %644 = vmatprep.subr.mxu0 0.0
        %645 = vmatpush2.xpose.msra.mxu0 0.0
        %646 = vmatprep.subr.mxu0 0.0
        %647 = vmatpush2.xpose.msra.mxu0 0.0
        %648 = vmatprep.subr.mxu0 0.0
        %649 = vmatpush2.xpose.msra.mxu0 0.0
        %650 = vmatprep.subr.mxu0 0.0
        %651 = vmatpush2.xpose.msra.mxu0 0.0
        %652 = vmatprep.subr.mxu0 0.0
        %653 = vmatpush2.xpose.msra.mxu0 0.0
        %654 = vmatprep.subr.mxu0 0.0
        %655 = vmatpush2.xpose.msra.mxu0 0.0
        %656 = vmatprep.subr.mxu0 0.0
        %657 = vmatpush2.xpose.msra.mxu0 0.0
        %658 = vmatprep.subr.mxu0 0.0
        %659 = vmatpush2.xpose.msra.mxu0 0.0
        %660 = vmatprep.subr.mxu0 0.0
        %661 = vmatpush2.xpose.msra.mxu0 0.0
        %662 = vmatprep.subr.mxu0 0.0
        %663 = vmatpush2.xpose.msra.mxu0 0.0
        %664 = vmatprep.subr.mxu0 0.0
        %665 = vmatpush2.xpose.msra.mxu0 0.0
        %666 = vmatprep.subr.mxu0 0.0
        %667 = vmatpush2.xpose.msra.mxu0 0.0
        %668 = vmatprep.subr.mxu0 0.0
        %669 = vmatpush2.xpose.msra.mxu0 0.0
        %670 = vmatprep.subr.mxu0 0.0
        %671 = vmatpush2.xpose.msra.mxu0 0.0
        %672 = vmatprep.mubr.f32.mxu0 %v598
        %673 = vmatmul.mubr.f32.gmra.mxu0 %v596
        %v674 = vpop.f32.mrf.mxu0
        %v675 = vadd.f32 0.0, %v674
        %v676 = vpop.f32.mrf.mxu0
        %677 = vdwg.mxu0
        %v678 = vld [vmem:[#allocation5] sm:$0xff]
        %680 = vset.pattern.permute.xlu0 0
        %681 = vperm.xlu0 %680, %v587
        %v682 = vpop.permute.xlu0 %681
        %v684 = vmul.f32 %v682, %v678
        %v685 = vadd.f32 %v684, %v675
        %vm686 = vcmask 523264
        %687 = vst.msk [vmem:[#allocation5] sm:$0xff] %vm686, %v685
        // Predicated region
        $region45: #{tpu_custom_call.1} parent=35 // pred_check
          %p688 = pneg %p250
        $region46: #{tpu_custom_call.1} parent=35 // pred_check_branch
          %690 = sbr.rel (%p688) target = $region48
        $region47: #{tpu_custom_call.1} parent=35 // pred_region
          %v691 = vld [vmem:[#allocation4] sm:$0xff]
          %v692 = vrcp.pop %v691
          %v693 = vld [vmem:[#allocation5] sm:$0xff]
          %695 = vset.pattern.permute.xlu0 0
          %696 = vperm.xlu0 %695, %v692
          %v697 = vpop.permute.xlu0 %696
          %v699 = vmul.f32 %v693, %v697
          %700 = vst.msk [vmem:[%s244] sm:$0xff] %vm686, %v699
        $region48: #{tpu_custom_call.1} parent=35 // pred_fallthru
          _
        %s701 = sand.u32 %s137, 1
        %s702 = scalar_lea.sflag [#allocation8], %s701
        %s703 = sand.u32 %s137, 1
        %s704 = smul.addr %s703, 8
        %s705 = scalar_lea.vmem [#allocation9], %s704
        // Predicated region
        $region49: #{tpu_custom_call.1} parent=35 // pred_check
          %p706 = pneg %p147
        $region50: #{tpu_custom_call.1} parent=35 // pred_check_branch
          %708 = sbr.rel (%p706) target = $region52
        $region51: #{tpu_custom_call.1} parent=35 // pred_region
          %s710 = ssub.s32 128, 128
          %711 = vsyncadd %s702, %s710
          %s712 = smul.addr %s25, 128
          %s713 = scalar_lea.hbm %s4, %s712
          %s715 = sshll.u32 %s705, 4
          %s716 = int_to_ptr.vmem [resolvable:$true] %s715
          %718 = dma.vmem_to_hbm [thread:$0]  %s716, 128, %s713, %s702
        $region52: #{tpu_custom_call.1} parent=35 // pred_fallthru
          _
      $region36: #{tpu_custom_call.1} parent=5 // pred_fallthru
        _
      %p719 = scmp.le.s32.totalorder 2, %s16
      // Predicated region
      $region53: #{tpu_custom_call.1} parent=5 // pred_check
        %p720 = pneg %p719
      $region54: #{tpu_custom_call.1} parent=5 // pred_check_branch
        %722 = sbr.rel (%p720) target = $region56
      $region55: #{tpu_custom_call.1} parent=5 // pred_region
        %s723 = ssub.s32 %s16, 2
        // Predicated region
        $region57: #{tpu_custom_call.1} parent=55 // pred_check
          %p724 = pneg %p153
        $region58: #{tpu_custom_call.1} parent=55 // pred_check_branch
          %726 = sbr.rel (%p724) target = $region60
        $region59: #{tpu_custom_call.1} parent=55 // pred_region
          %s727 = sand.u32 %s138, 1
          %s728 = scalar_lea.sflag [#allocation8], %s727
          %s729 = sand.u32 %s138, 1
          %s730 = smul.addr %s729, 8
          %s731 = scalar_lea.vmem [#allocation9], %s730
          %732 = dma.done %s728, 128
        $region60: #{tpu_custom_call.1} parent=55 // pred_fallthru
          _
      $region56: #{tpu_custom_call.1} parent=5 // pred_fallthru
        _
    $region6: #{tpu_custom_call.1} parent=1 // loop_footer
      %s20 = sadd.s32 1, %s16
    $region7: #{tpu_custom_call.1} parent=1 // loop_footer_branch
      %15 = sbr.rel target = $region3
    $region8: #{tpu_custom_call.1} parent=1 // loop_exit
      _
    %733 = vsyncpa [#allocation7], 1
    %s734 = scalar_lea.sflag [#allocation7], 1
    %735 = vsyncpa %s734, 1
    %736 = vsyncpa [#allocation8], 1
    %s737 = scalar_lea.sflag [#allocation8], 1
    %738 = vsyncpa %s737, 1

</llo_original>
